<compile_context>
chip_gen: v6e
topology: v6e:2x2x1
jax: 0.10.0
libtpu: 0.0.40
codegen_flags: <defaults>
</compile_context>

<pallas_src>
import jax
import jax.numpy as jnp
from jax.experimental import pallas as pl
from jax.experimental.pallas import tpu as pltpu


# ---- static layout constants (JAX shapes are static, so the shape-dependent
# ---- torch branch is resolved in Python in the wrapper) ---------------------
_RW, _KW, _NOUT = 6, 5, 3          # w: (6,5), Linear(5,3)
_R, _F = 8, 4                      # y: (8,4), x: (4,), z: (32,) == (8,4) flat

# data slab: (24, 8) f32
#   rows 0:8 , lanes 0:4 -> y                   (8,4)
#   rows 0:8 , lanes 4:8 -> z.reshape(8,4)      (row-major == torch flatten order)
#   rows 8:14, lanes 0:5 -> w   (rows 14,15 of the 8-row window stay zero)
#   row  16  , lanes 0:4 -> x
_DATA_ROWS, _DATA_LANES = 24, 8
# param slab: (8, 4) f32
#   rows 0:5, lanes 0:3 -> lin_weight.T  (5,3)  (transposed ONCE at init time)
#   row  5  , lanes 0:3 -> lin_bias
_PAR_ROWS, _PAR_LANES = 8, 4

_OUT_LANES = 128                   # lane-dense output slab -> unmasked store


def _dynamic_model_kernel(data_ref, par_ref, out_ref):
    y   = data_ref[0:_R, 0:_F]                    # (8,4)
    z2d = data_ref[0:_R, _F:2 * _F]               # (8,4)
    w8  = data_ref[_R:_R + 8, 0:_KW]              # (8,5); rows 6,7 are zero pad
    xr  = data_ref[16:17, 0:_F]                   # (1,4)

    # x3 = flatten(x + y) + z  (pure VPU elementwise on the (8,4) tile)
    x3 = xr + y + z2d

    # x1 = w @ W^T + b, computed on the VPU as K=5 broadcast multiply-adds.
    # Keeping this off the MXU avoids pipeline fill + result-FIFO drain for a
    # matmul that would pad to a full MXU tile.
    wt = par_ref[0:_KW, 0:_NOUT]                  # (5,3) = lin_weight.T
    b  = par_ref[_KW:_KW + 1, 0:_NOUT]            # (1,3)
    acc = w8[:, 0:1] * wt[0:1, :]                 # (8,1)*(1,3) -> (8,3)
    for k in range(1, _KW):                       # unrolled at trace time
        acc = acc + w8[:, k:k + 1] * wt[k:k + 1, :]
    x1_8 = acc + b                                # (8,3); rows 6,7 are junk pad

    # Single lane-dense (8,128) write: lanes 0:4 = x3, lanes 4:7 = x1, rest 0.
    pad = jnp.zeros((_R, _OUT_LANES - _F - _NOUT), jnp.float32)
    out_ref[...] = jnp.concatenate([x3, x1_8, pad], axis=-1)


def pack_params(lin_weight, lin_bias):
    """Init-time packing of the Linear(5,3) parameters.  The transpose happens
    here, once, and never in the per-call forward path."""
    p = jnp.zeros((_PAR_ROWS, _PAR_LANES), jnp.float32)
    p = p.at[0:_KW, 0:_NOUT].set(lin_weight.T.astype(jnp.float32))
    p = p.at[_KW, 0:_NOUT].set(lin_bias.astype(jnp.float32))
    return p


def _pack_data(w, x, y, z):
    """Per-call packing of the runtime operands into one lane-dense slab
    (cuts input DMA descriptors from 5 to 1)."""
    d = jnp.zeros((_DATA_ROWS, _DATA_LANES), jnp.float32)
    d = d.at[0:_R, 0:_F].set(y.astype(jnp.float32))
    d = d.at[0:_R, _F:2 * _F].set(z.reshape(_R, _F).astype(jnp.float32))
    d = d.at[_R:_R + _RW, 0:_KW].set(w.astype(jnp.float32))
    d = d.at[16, 0:_F].set(x.astype(jnp.float32))
    return d


def dynamic_model_forward(w, x, y, z, params_packed):
    """Mirrors DynamicModel.forward. Shapes are static in JAX, so the
    shape-dependent branch resolves in Python here."""
    assert w.shape[0] <= 512
    assert x.shape[0] >= 4                         # torch._check equivalent

    if w.shape[0] != x.shape[0] + 2:               # "else" branch of the module
        return w

    assert w.shape == (_RW, _KW)
    assert y.shape == (_R, _F) and x.shape == (_F,) and z.shape == (_R * _F,)

    data_packed = _pack_data(w, x, y, z)

    cost = pl.CostEstimate(
        flops=2 * _RW * _KW * _NOUT + 2 * _R * _F,     # scheduling hint only
        transcendentals=0,
        bytes_accessed=4 * (_DATA_ROWS * _DATA_LANES
                            + _PAR_ROWS * _PAR_LANES
                            + _R * _OUT_LANES),
    )

    out = pl.pallas_call(
        _dynamic_model_kernel,
        out_shape=jax.ShapeDtypeStruct((_R, _OUT_LANES), jnp.float32),
        in_specs=[pl.BlockSpec(memory_space=pltpu.MemorySpace.VMEM)] * 2,
        out_specs=pl.BlockSpec(memory_space=pltpu.MemorySpace.VMEM),
        cost_estimate=cost,
    )(data_packed, params_packed)

    x1 = out[0:_RW, _F:_F + _NOUT]                 # (6, 3)
    x3 = out[:, 0:_F].reshape(_R * _F)             # (32,)
    return x1, x3


if __name__ == "__main__":
    key = jax.random.PRNGKey(0)
    kw, kx, ky, kz, kW, kb = jax.random.split(key, 6)

    # Shapes implied by the tutorial module.
    w = jax.random.normal(kw, (6, 5), dtype=jnp.float32)
    x = jax.random.normal(kx, (4,), dtype=jnp.float32)
    y = jax.random.normal(ky, (8, 4), dtype=jnp.float32)
    z = jax.random.normal(kz, (32,), dtype=jnp.float32)

    # Deterministic Linear(5, 3) parameters (synthetic, not a checkpoint).
    lin_weight = jax.random.normal(kW, (3, 5), dtype=jnp.float32) * 0.1
    lin_bias = jax.random.normal(kb, (3,), dtype=jnp.float32) * 0.1

    params_packed = pack_params(lin_weight, lin_bias)   # init-time, cacheable

    x1, x3 = dynamic_model_forward(w, x, y, z, params_packed)
    jax.block_until_ready((x1, x3))

    # Reference check in plain JAX.
    x1_ref = w @ lin_weight.T + lin_bias
    x3_ref = (x + y).reshape(-1) + z
    assert x1.shape == (6, 3) and x3.shape == (32,)
    assert jnp.allclose(x1, x1_ref, atol=1e-5), "x1 mismatch"
    assert jnp.allclose(x3, x3_ref, atol=1e-5), "x3 mismatch"

    print("KERNEL_OK")
</pallas_src>

<mosaic_0001>
module attributes {stable_mosaic.version = 11 : i64} {
  func.func @_dynamic_model_kernel(%arg0: memref<24x8xf32, #tpu.memory_space<vmem>>, %arg1: memref<8x4xf32, #tpu.memory_space<vmem>>, %arg2: memref<8x128xf32, #tpu.memory_space<vmem>>) attributes {dimension_semantics = [], scalar_prefetch = 0 : i64, scratch_operands = 0 : i64, tpu.core_type = #tpu.core_type<tc>} {
    %c0 = arith.constant 0 : index
    %c0_0 = arith.constant 0 : index
    %0 = vector.load %arg0[%c0, %c0_0] : memref<24x8xf32, #tpu.memory_space<vmem>>, vector<8x4xf32>
    %c0_1 = arith.constant 0 : index
    %c4 = arith.constant 4 : index
    %1 = vector.load %arg0[%c0_1, %c4] : memref<24x8xf32, #tpu.memory_space<vmem>>, vector<8x4xf32>
    %c8 = arith.constant 8 : index
    %c0_2 = arith.constant 0 : index
    %2 = vector.load %arg0[%c8, %c0_2] : memref<24x8xf32, #tpu.memory_space<vmem>>, vector<8x5xf32>
    %c16 = arith.constant 16 : index
    %c0_3 = arith.constant 0 : index
    %3 = vector.load %arg0[%c16, %c0_3] : memref<24x8xf32, #tpu.memory_space<vmem>>, vector<1x4xf32>
    %4 = vector.broadcast %3 : vector<1x4xf32> to vector<8x4xf32>
    %5 = arith.addf %4, %0 : vector<8x4xf32>
    %6 = arith.addf %5, %1 : vector<8x4xf32>
    %c0_4 = arith.constant 0 : index
    %c0_5 = arith.constant 0 : index
    %7 = vector.load %arg1[%c0_4, %c0_5] : memref<8x4xf32, #tpu.memory_space<vmem>>, vector<5x3xf32>
    %c5 = arith.constant 5 : index
    %c0_6 = arith.constant 0 : index
    %8 = vector.load %arg1[%c5, %c0_6] : memref<8x4xf32, #tpu.memory_space<vmem>>, vector<1x3xf32>
    %9 = vector.extract_strided_slice %2 {offsets = [0, 0], sizes = [8, 1], strides = [1, 1]} : vector<8x5xf32> to vector<8x1xf32>
    %10 = vector.extract_strided_slice %7 {offsets = [0, 0], sizes = [1, 3], strides = [1, 1]} : vector<5x3xf32> to vector<1x3xf32>
    %11 = vector.broadcast %9 : vector<8x1xf32> to vector<8x3xf32>
    %12 = vector.broadcast %10 : vector<1x3xf32> to vector<8x3xf32>
    %13 = arith.mulf %11, %12 : vector<8x3xf32>
    %14 = vector.extract_strided_slice %2 {offsets = [0, 1], sizes = [8, 1], strides = [1, 1]} : vector<8x5xf32> to vector<8x1xf32>
    %15 = vector.extract_strided_slice %7 {offsets = [1, 0], sizes = [1, 3], strides = [1, 1]} : vector<5x3xf32> to vector<1x3xf32>
    %16 = vector.broadcast %14 : vector<8x1xf32> to vector<8x3xf32>
    %17 = vector.broadcast %15 : vector<1x3xf32> to vector<8x3xf32>
    %18 = arith.mulf %16, %17 : vector<8x3xf32>
    %19 = arith.addf %13, %18 : vector<8x3xf32>
    %20 = vector.extract_strided_slice %2 {offsets = [0, 2], sizes = [8, 1], strides = [1, 1]} : vector<8x5xf32> to vector<8x1xf32>
    %21 = vector.extract_strided_slice %7 {offsets = [2, 0], sizes = [1, 3], strides = [1, 1]} : vector<5x3xf32> to vector<1x3xf32>
    %22 = vector.broadcast %20 : vector<8x1xf32> to vector<8x3xf32>
    %23 = vector.broadcast %21 : vector<1x3xf32> to vector<8x3xf32>
    %24 = arith.mulf %22, %23 : vector<8x3xf32>
    %25 = arith.addf %19, %24 : vector<8x3xf32>
    %26 = vector.extract_strided_slice %2 {offsets = [0, 3], sizes = [8, 1], strides = [1, 1]} : vector<8x5xf32> to vector<8x1xf32>
    %27 = vector.extract_strided_slice %7 {offsets = [3, 0], sizes = [1, 3], strides = [1, 1]} : vector<5x3xf32> to vector<1x3xf32>
    %28 = vector.broadcast %26 : vector<8x1xf32> to vector<8x3xf32>
    %29 = vector.broadcast %27 : vector<1x3xf32> to vector<8x3xf32>
    %30 = arith.mulf %28, %29 : vector<8x3xf32>
    %31 = arith.addf %25, %30 : vector<8x3xf32>
    %32 = vector.extract_strided_slice %2 {offsets = [0, 4], sizes = [8, 1], strides = [1, 1]} : vector<8x5xf32> to vector<8x1xf32>
    %33 = vector.extract_strided_slice %7 {offsets = [4, 0], sizes = [1, 3], strides = [1, 1]} : vector<5x3xf32> to vector<1x3xf32>
    %34 = vector.broadcast %32 : vector<8x1xf32> to vector<8x3xf32>
    %35 = vector.broadcast %33 : vector<1x3xf32> to vector<8x3xf32>
    %36 = arith.mulf %34, %35 : vector<8x3xf32>
    %37 = arith.addf %31, %36 : vector<8x3xf32>
    %38 = vector.broadcast %8 : vector<1x3xf32> to vector<8x3xf32>
    %39 = arith.addf %37, %38 : vector<8x3xf32>
    %cst = arith.constant 0.000000e+00 : f32
    %40 = vector.broadcast %cst : f32 to vector<8x121xf32>
    %41 = tpu.concatenate %6, %39, %40 in 1 : vector<8x4xf32>, vector<8x3xf32>, vector<8x121xf32> -> vector<8x128xf32>
    %c0_7 = arith.constant 0 : index
    %c0_8 = arith.constant 0 : index
    %42 = vector.load %arg2[%c0_7, %c0_8] : memref<8x128xf32, #tpu.memory_space<vmem>>, vector<8x128xf32>
    tpu.vector_store %arg2[%c0_7, %c0_8], %41 {strides = array<i32>} : memref<8x128xf32, #tpu.memory_space<vmem>>, vector<8x128xf32>,
    return
  }
}

</mosaic_0001>

<llo_original>
// kernel: tpu_custom_call.1
$region0: #{tpu_custom_call.1}
  #allocation0 [shape = 'u32[]', space=smem, size = 0x4, offset = 0x4, fixed_abs, tag = 'smem constant byte address 0x4 - core index']
  #allocation1 [shape = 'u32[144,128]{1,0:T(1,128)}', space=vmem, size = 0x12000, scoped, tag = 'internal scratch']
  %s0 = inlined_call_operand.vmem [shape: f32[24,8], index: 0, kind: input, shape index: {}]
  %s1 = inlined_call_operand.vmem [shape: f32[8,4], index: 1, kind: input, shape index: {}]
  %s2 = inlined_call_operand.hbm [shape: f32[8,128], index: 2, kind: output, shape index: {}]
  %s3 = sld [smem:[#allocation0]]
  $region18: #{tpu_custom_call.1} parent=0
    _
  %s5 = ssub.s32 1, %s3
  %s6 = scalar_select 0, %s5, %s3
  $region1: #{tpu_custom_call.1} parent=0
    #allocation2 [shape = 'u8[4096]{0}', space=vmem, size = 0x1000, scoped, tag = 'output window, operand 0, single buffered']
    #allocation3 [shape = 's32[1]{0}', space=sflag, size = 0x4, scoped, tag = 'scoped memory for tpu_custom_call.1']
    %7 = vsyncpa [#allocation3], 0
    // Predicated region
    $region2: #{tpu_custom_call.1} parent=1 // pred_check
      _
    $region3: #{tpu_custom_call.1} parent=1 // pred_check_branch
      %9 = sbr.rel (0) target = $region5
    $region4: #{tpu_custom_call.1} parent=1 // pred_region
      _
    $region5: #{tpu_custom_call.1} parent=1 // pred_fallthru
      _
    // Predicated region
    $region6: #{tpu_custom_call.1} parent=1 // pred_check
      _
    $region7: #{tpu_custom_call.1} parent=1 // pred_check_branch
      %11 = sbr.rel (0) target = $region9
    $region8: #{tpu_custom_call.1} parent=1 // pred_region
      _
    $region9: #{tpu_custom_call.1} parent=1 // pred_fallthru
      _
    %v12 = vld [vmem:[%s0] sm:$0xff]
    %v13 = vld [vmem:[%s0 + $0x8] sm:$0xff]
    %v14 = vld [vmem:[%s0 + $0x10] sm:$0x1]
    %v15 = vlaneseq
    %v16 = vshrl.u32 %v15, 7
    %v17 = vsub.s32 0, %v16
    %v18 = vrot.slane %v14, %v17
    %v19 = vadd.f32 %v18, %v12
    %21 = vrot.lane.b32.xlu0 %v12, 124
    %v22 = vpop.permute.xlu0 %21
    %v24 = vadd.f32 %v19, %v22
    %v25 = vld [vmem:[%s1] sm:$0x1f]
    %v26 = vld [vmem:[%s1 + $0x5] sm:$0x1]
    %28 = vset.pattern.permute.xlu0 0
    %29 = vperm.xlu0 %28, %v13
    %v30 = vpop.permute.xlu0 %29
    %v32 = vlaneseq
    %v33 = vshrl.u32 %v32, 7
    %v34 = vsub.s32 0, %v33
    %v35 = vrot.slane %v25, %v34
    %v36 = vmul.f32 %v30, %v35
    %37 = vset.pattern.permute.xlu0 1
    %38 = vperm.xlu0 %37, %v13
    %v39 = vpop.permute.xlu0 %38
    %v41 = vlaneseq
    %v42 = vshrl.u32 %v41, 7
    %v43 = vsub.s32 1, %v42
    %v44 = vrot.slane %v25, %v43
    %v45 = vmul.f32 %v39, %v44
    %v46 = vadd.f32 %v36, %v45
    %47 = vset.pattern.permute.xlu0 2
    %48 = vperm.xlu0 %47, %v13
    %v49 = vpop.permute.xlu0 %48
    %v51 = vlaneseq
    %v52 = vshrl.u32 %v51, 7
    %v53 = vsub.s32 2, %v52
    %v54 = vrot.slane %v25, %v53
    %v55 = vmul.f32 %v49, %v54
    %v56 = vadd.f32 %v46, %v55
    %57 = vset.pattern.permute.xlu0 3
    %58 = vperm.xlu0 %57, %v13
    %v59 = vpop.permute.xlu0 %58
    %v61 = vlaneseq
    %v62 = vshrl.u32 %v61, 7
    %v63 = vsub.s32 3, %v62
    %v64 = vrot.slane %v25, %v63
    %v65 = vmul.f32 %v59, %v64
    %v66 = vadd.f32 %v56, %v65
    %67 = vset.pattern.permute.xlu0 4
    %68 = vperm.xlu0 %67, %v13
    %v69 = vpop.permute.xlu0 %68
    %v71 = vlaneseq
    %v72 = vshrl.u32 %v71, 7
    %v73 = vsub.s32 4, %v72
    %v74 = vrot.slane %v25, %v73
    %v75 = vmul.f32 %v69, %v74
    %v76 = vadd.f32 %v66, %v75
    %v77 = vlaneseq
    %v78 = vshrl.u32 %v77, 7
    %v79 = vsub.s32 0, %v78
    %v80 = vrot.slane %v26, %v79
    %v81 = vadd.f32 %v76, %v80
    %83 = vrot.lane.b32.xlu0 %v81, 4
    %v84 = vpop.permute.xlu0 %83
    %vm86 = vcmask 31744
    %v87 = vsel %vm86, %v24, %v84
    %vm88 = vcmask 56320
    %v89 = vsel %vm88, %v87, 0.0
    %90 = vst [vmem:[#allocation2] sm:$0xff] %v89
    // Predicated region
    $region10: #{tpu_custom_call.1} parent=1 // pred_check
      _
    $region11: #{tpu_custom_call.1} parent=1 // pred_check_branch
      %92 = sbr.rel (0) target = $region13
    $region12: #{tpu_custom_call.1} parent=1 // pred_region
      %s94 = ssub.s32 128, 128
      %95 = vsyncadd [#allocation3], %s94
      %s97 = sshll.u32 [#allocation2], 4
      %s98 = int_to_ptr.vmem [resolvable:$true] %s97
      %100 = dma.vmem_to_hbm [thread:$0]  %s98, 128, %s2, [#allocation3]
    $region13: #{tpu_custom_call.1} parent=1 // pred_fallthru
      _
    // Predicated region
    $region14: #{tpu_custom_call.1} parent=1 // pred_check
      _
    $region15: #{tpu_custom_call.1} parent=1 // pred_check_branch
      %102 = sbr.rel (0) target = $region17
    $region16: #{tpu_custom_call.1} parent=1 // pred_region
      %103 = dma.done [#allocation3], 128
    $region17: #{tpu_custom_call.1} parent=1 // pred_fallthru
      _
    %104 = vsyncpa [#allocation3], 1

</llo_original>
